<compile_context>
chip_gen: v6e
topology: v6e:2x2x1
jax: 0.10.0
libtpu: 0.0.40
codegen_flags: <defaults>
</compile_context>

<pallas_src>
import functools

import jax
import jax.numpy as jnp
from jax.experimental import pallas as pl
from jax.experimental.pallas import tpu as pltpu


def _round_up(x, m):
    return (x + m - 1) // m * m


def _mlp_kernel(x_ref,
                w1_ref, b1_ref,
                w2_ref, b2_ref,
                w3_ref, b3_ref,
                w4_ref, b4_ref,
                o_ref):
    """Fused 4-layer MLP on one batch tile: bf16 MXU matmuls, f32 accumulate."""

    def layer(h_bf16, w_ref, b_ref, relu):
        acc = jnp.dot(h_bf16, w_ref[...],
                      preferred_element_type=jnp.float32) + b_ref[...]
        if relu:
            acc = jnp.maximum(acc, 0.0)
        return acc

    h = x_ref[...]                                        # bf16 input tile
    h = layer(h, w1_ref, b1_ref, relu=True).astype(jnp.bfloat16)
    h = layer(h, w2_ref, b2_ref, relu=True).astype(jnp.bfloat16)
    h = layer(h, w3_ref, b3_ref, relu=True).astype(jnp.bfloat16)
    out = layer(h, w4_ref, b4_ref, relu=False)            # f32
    o_ref[...] = out.astype(o_ref.dtype)


@functools.partial(jax.jit, static_argnames=("block_b",))
def net_forward(x, params, *, block_b=None):
    """Run the fused MLP. x: [B, n] float32. params: dict of W/b arrays."""
    B, n = x.shape
    w1, b1 = params["w1"], params["b1"]
    w2, b2 = params["w2"], params["b2"]
    w3, b3 = params["w3"], params["b3"]
    w4, b4 = params["w4"], params["b4"]
    m1, m2, m3, c = w1.shape[1], w2.shape[1], w3.shape[1], w4.shape[1]

    # --- pad all feature dims to 128 lanes (zero padding is exact: padded
    # hidden units see zero weight columns and zero bias, relu(0) = 0). ------
    n_p, m1_p, m2_p = _round_up(n, 128), _round_up(m1, 128), _round_up(m2, 128)
    m3_p, c_p = _round_up(m3, 128), _round_up(c, 128)

    def pad_w(w, rdim, cdim):
        return jnp.pad(w, ((0, rdim - w.shape[0]), (0, cdim - w.shape[1])))

    def pad_b(b, cdim):
        return jnp.pad(b, ((0, 0), (0, cdim - b.shape[1])))

    # Weights as bf16 (native MXU dtype, half the HBM/VMEM traffic); biases f32.
    w1p = pad_w(w1, n_p, m1_p).astype(jnp.bfloat16)
    w2p = pad_w(w2, m1_p, m2_p).astype(jnp.bfloat16)
    w3p = pad_w(w3, m2_p, m3_p).astype(jnp.bfloat16)
    w4p = pad_w(w4, m3_p, c_p).astype(jnp.bfloat16)
    b1p = pad_b(b1, m1_p).astype(jnp.float32)
    b2p = pad_b(b2, m2_p).astype(jnp.float32)
    b3p = pad_b(b3, m3_p).astype(jnp.float32)
    b4p = pad_b(b4, c_p).astype(jnp.float32)

    # --- batch tile: big tiles for big B, but keep >= 2 grid steps so a v7x
    # megacore can shard the "parallel" axis across its two TensorCores. -----
    if block_b is None:
        if B >= 256:
            block_b = 128
        else:
            block_b = max(8, _round_up(-(-B // 2), 8))
    B_p = _round_up(B, block_b)

    x_p = jnp.pad(x.astype(jnp.bfloat16), ((0, B_p - B), (0, n_p - n)))

    grid = (B_p // block_b,)

    # --- static VMEM budget check (v7x has only 64 MiB physical VMEM).
    # Weights are single-buffered (constant index_map); the streamed x/out
    # tiles are double-buffered by the pipeline.
    w_bytes = sum(a.size * a.dtype.itemsize
                  for a in (w1p, w2p, w3p, w4p, b1p, b2p, b3p, b4p))
    tile_bytes = 2 * (block_b * n_p * 2 + block_b * c_p * 4)
    vmem_est = 2 * w_bytes + tile_bytes          # 2x safety margin on weights
    if vmem_est > 48 * 1024 * 1024:
        # TODO(synk): tile over hidden dims / stream weight slabs when the
        # resident weight set no longer fits v7x VMEM.
        raise ValueError(f"fused-MLP VMEM estimate {vmem_est} B too large")

    def resident(arr):  # whole (padded) parameter resident every grid step
        return pl.BlockSpec(arr.shape, lambda i: (0, 0))

    out_p = pl.pallas_call(
        _mlp_kernel,
        out_shape=jax.ShapeDtypeStruct((B_p, c_p), jnp.float32),
        grid_spec=pltpu.PrefetchScalarGridSpec(
            num_scalar_prefetch=0,
            grid=grid,
            in_specs=[
                pl.BlockSpec((block_b, n_p), lambda i: (i, 0)),   # x tile
                resident(w1p), resident(b1p),
                resident(w2p), resident(b2p),
                resident(w3p), resident(b3p),
                resident(w4p), resident(b4p),
            ],
            out_specs=pl.BlockSpec((block_b, c_p), lambda i: (i, 0)),
        ),
        compiler_params=pltpu.CompilerParams(
            dimension_semantics=("parallel",),
            vmem_limit_bytes=48 * 1024 * 1024,
        ),
    )(x_p, w1p, b1p, w2p, b2p, w3p, b3p, w4p, b4p)

    return out_p[:B, :c]


def init_params(key, n, m1, m2, m3, c, dtype=jnp.float32):
    """Deterministic init matching nn.Linear's U(-1/sqrt(fan_in), 1/sqrt(fan_in)).

    Weights stored as [in, out] (transposed vs PyTorch), biases as [1, out].
    """
    dims = [(n, m1), (m1, m2), (m2, m3), (m3, c)]
    params = {}
    for idx, (fan_in, fan_out) in enumerate(dims, start=1):
        key, kw, kb = jax.random.split(key, 3)
        bound = 1.0 / float(fan_in) ** 0.5
        params[f"w{idx}"] = jax.random.uniform(
            kw, (fan_in, fan_out), dtype, minval=-bound, maxval=bound)
        params[f"b{idx}"] = jax.random.uniform(
            kb, (1, fan_out), dtype, minval=-bound, maxval=bound)
    return params


def net_forward_ref(x, params):
    """Pure-JAX f32 reference for correctness checking."""
    h = jnp.maximum(x @ params["w1"] + params["b1"], 0.0)
    h = jnp.maximum(h @ params["w2"] + params["b2"], 0.0)
    h = jnp.maximum(h @ params["w3"] + params["b3"], 0.0)
    return h @ params["w4"] + params["b4"]


if __name__ == "__main__":
    # Shapes consistent with Net(n, m1, m2, m3, c); batch large enough for
    # two 128-row grid steps while staying tiny overall.
    B, n, m1, m2, m3, c = 256, 32, 64, 64, 32, 16

    key = jax.random.PRNGKey(0)
    key, kx = jax.random.split(key)
    x = jax.random.normal(kx, (B, n), jnp.float32)
    params = init_params(key, n, m1, m2, m3, c)

    out = net_forward(x, params)
    out = jax.block_until_ready(out)

    ref = net_forward_ref(x, params)
    assert out.shape == (B, c), out.shape
    # bf16 matmul operands (f32 accumulation) -> loosened tolerance vs f32 ref.
    max_err = float(jnp.max(jnp.abs(out - ref)))
    assert jnp.allclose(out, ref, atol=5e-2, rtol=5e-2), max_err

    print("KERNEL_OK")
</pallas_src>

<mosaic_0001>
module attributes {stable_mosaic.version = 11 : i64} {
  func.func @_mlp_kernel(%arg0: i32, %arg1: memref<128x128xbf16, #tpu.memory_space<vmem>>, %arg2: memref<128x128xbf16, #tpu.memory_space<vmem>>, %arg3: memref<1x128xf32, #tpu.memory_space<vmem>>, %arg4: memref<128x128xbf16, #tpu.memory_space<vmem>>, %arg5: memref<1x128xf32, #tpu.memory_space<vmem>>, %arg6: memref<128x128xbf16, #tpu.memory_space<vmem>>, %arg7: memref<1x128xf32, #tpu.memory_space<vmem>>, %arg8: memref<128x128xbf16, #tpu.memory_space<vmem>>, %arg9: memref<1x128xf32, #tpu.memory_space<vmem>>, %arg10: memref<128x128xf32, #tpu.memory_space<vmem>>) attributes {dimension_semantics = [#tpu.dimension_semantics<parallel>], iteration_bounds = array<i64: 2>, scalar_prefetch = 0 : i64, scratch_operands = 0 : i64, tpu.core_type = #tpu.core_type<tc>, window_params = [{transform_indices = @transform_0, window_bounds = array<i64: 128, 128>}, {pipeline_mode = #tpu.pipeline_mode<synchronous>, transform_indices = @transform_1, window_bounds = array<i64: 128, 128>}, {pipeline_mode = #tpu.pipeline_mode<synchronous>, transform_indices = @transform_2, window_bounds = array<i64: 1, 128>}, {pipeline_mode = #tpu.pipeline_mode<synchronous>, transform_indices = @transform_3, window_bounds = array<i64: 128, 128>}, {pipeline_mode = #tpu.pipeline_mode<synchronous>, transform_indices = @transform_4, window_bounds = array<i64: 1, 128>}, {pipeline_mode = #tpu.pipeline_mode<synchronous>, transform_indices = @transform_5, window_bounds = array<i64: 128, 128>}, {pipeline_mode = #tpu.pipeline_mode<synchronous>, transform_indices = @transform_6, window_bounds = array<i64: 1, 128>}, {pipeline_mode = #tpu.pipeline_mode<synchronous>, transform_indices = @transform_7, window_bounds = array<i64: 128, 128>}, {pipeline_mode = #tpu.pipeline_mode<synchronous>, transform_indices = @transform_8, window_bounds = array<i64: 1, 128>}, {transform_indices = @transform_9, window_bounds = array<i64: 128, 128>}]} {
    %c0 = arith.constant 0 : index
    %c0_0 = arith.constant 0 : index
    %0 = vector.load %arg1[%c0, %c0_0] : memref<128x128xbf16, #tpu.memory_space<vmem>>, vector<128x128xbf16>
    %c0_1 = arith.constant 0 : index
    %c0_2 = arith.constant 0 : index
    %1 = vector.load %arg2[%c0_1, %c0_2] : memref<128x128xbf16, #tpu.memory_space<vmem>>, vector<128x128xbf16>
    %cst = arith.constant dense<0.000000e+00> : vector<128x128xf32>
    %2 = tpu.matmul %0, %1, %cst {dimension_numbers = #tpu.dot_dimension_numbers<[1], [0], [0], [1], [0, 0, 1, 1], [], []>} : vector<128x128xbf16>, vector<128x128xbf16>, vector<128x128xf32> -> vector<128x128xf32>
    %c0_3 = arith.constant 0 : index
    %c0_4 = arith.constant 0 : index
    %3 = vector.load %arg3[%c0_3, %c0_4] : memref<1x128xf32, #tpu.memory_space<vmem>>, vector<1x128xf32>
    %4 = vector.broadcast %3 : vector<1x128xf32> to vector<128x128xf32>
    %5 = arith.addf %2, %4 : vector<128x128xf32>
    %cst_5 = arith.constant 0.000000e+00 : f32
    %6 = vector.broadcast %cst_5 : f32 to vector<128x128xf32>
    %7 = arith.maximumf %5, %6 : vector<128x128xf32>
    %8 = arith.truncf %7 : vector<128x128xf32> to vector<128x128xbf16>
    %c0_6 = arith.constant 0 : index
    %c0_7 = arith.constant 0 : index
    %9 = vector.load %arg4[%c0_6, %c0_7] : memref<128x128xbf16, #tpu.memory_space<vmem>>, vector<128x128xbf16>
    %cst_8 = arith.constant dense<0.000000e+00> : vector<128x128xf32>
    %10 = tpu.matmul %8, %9, %cst_8 {dimension_numbers = #tpu.dot_dimension_numbers<[1], [0], [0], [1], [0, 0, 1, 1], [], []>} : vector<128x128xbf16>, vector<128x128xbf16>, vector<128x128xf32> -> vector<128x128xf32>
    %c0_9 = arith.constant 0 : index
    %c0_10 = arith.constant 0 : index
    %11 = vector.load %arg5[%c0_9, %c0_10] : memref<1x128xf32, #tpu.memory_space<vmem>>, vector<1x128xf32>
    %12 = vector.broadcast %11 : vector<1x128xf32> to vector<128x128xf32>
    %13 = arith.addf %10, %12 : vector<128x128xf32>
    %cst_11 = arith.constant 0.000000e+00 : f32
    %14 = vector.broadcast %cst_11 : f32 to vector<128x128xf32>
    %15 = arith.maximumf %13, %14 : vector<128x128xf32>
    %16 = arith.truncf %15 : vector<128x128xf32> to vector<128x128xbf16>
    %c0_12 = arith.constant 0 : index
    %c0_13 = arith.constant 0 : index
    %17 = vector.load %arg6[%c0_12, %c0_13] : memref<128x128xbf16, #tpu.memory_space<vmem>>, vector<128x128xbf16>
    %cst_14 = arith.constant dense<0.000000e+00> : vector<128x128xf32>
    %18 = tpu.matmul %16, %17, %cst_14 {dimension_numbers = #tpu.dot_dimension_numbers<[1], [0], [0], [1], [0, 0, 1, 1], [], []>} : vector<128x128xbf16>, vector<128x128xbf16>, vector<128x128xf32> -> vector<128x128xf32>
    %c0_15 = arith.constant 0 : index
    %c0_16 = arith.constant 0 : index
    %19 = vector.load %arg7[%c0_15, %c0_16] : memref<1x128xf32, #tpu.memory_space<vmem>>, vector<1x128xf32>
    %20 = vector.broadcast %19 : vector<1x128xf32> to vector<128x128xf32>
    %21 = arith.addf %18, %20 : vector<128x128xf32>
    %cst_17 = arith.constant 0.000000e+00 : f32
    %22 = vector.broadcast %cst_17 : f32 to vector<128x128xf32>
    %23 = arith.maximumf %21, %22 : vector<128x128xf32>
    %24 = arith.truncf %23 : vector<128x128xf32> to vector<128x128xbf16>
    %c0_18 = arith.constant 0 : index
    %c0_19 = arith.constant 0 : index
    %25 = vector.load %arg8[%c0_18, %c0_19] : memref<128x128xbf16, #tpu.memory_space<vmem>>, vector<128x128xbf16>
    %cst_20 = arith.constant dense<0.000000e+00> : vector<128x128xf32>
    %26 = tpu.matmul %24, %25, %cst_20 {dimension_numbers = #tpu.dot_dimension_numbers<[1], [0], [0], [1], [0, 0, 1, 1], [], []>} : vector<128x128xbf16>, vector<128x128xbf16>, vector<128x128xf32> -> vector<128x128xf32>
    %c0_21 = arith.constant 0 : index
    %c0_22 = arith.constant 0 : index
    %27 = vector.load %arg9[%c0_21, %c0_22] : memref<1x128xf32, #tpu.memory_space<vmem>>, vector<1x128xf32>
    %28 = vector.broadcast %27 : vector<1x128xf32> to vector<128x128xf32>
    %29 = arith.addf %26, %28 : vector<128x128xf32>
    %c0_23 = arith.constant 0 : index
    %c0_24 = arith.constant 0 : index
    %30 = vector.load %arg10[%c0_23, %c0_24] : memref<128x128xf32, #tpu.memory_space<vmem>>, vector<128x128xf32>
    tpu.vector_store %arg10[%c0_23, %c0_24], %29 {strides = array<i32>} : memref<128x128xf32, #tpu.memory_space<vmem>>, vector<128x128xf32>,
    return
  }
  func.func @transform_0(%arg0: i32) -> (i32, i32) {
    %c0_i32 = arith.constant 0 : i32
    %c0_i32_0 = arith.constant 0 : i32
    return %arg0, %c0_i32 : i32, i32
  }
  func.func @transform_1(%arg0: i32) -> (i32, i32) {
    %c0_i32 = arith.constant 0 : i32
    %c0_i32_0 = arith.constant 0 : i32
    %c0_i32_1 = arith.constant 0 : i32
    return %c0_i32, %c0_i32_0 : i32, i32
  }
  func.func @transform_2(%arg0: i32) -> (i32, i32) {
    %c0_i32 = arith.constant 0 : i32
    %c0_i32_0 = arith.constant 0 : i32
    %c0_i32_1 = arith.constant 0 : i32
    return %c0_i32, %c0_i32_0 : i32, i32
  }
  func.func @transform_3(%arg0: i32) -> (i32, i32) {
    %c0_i32 = arith.constant 0 : i32
    %c0_i32_0 = arith.constant 0 : i32
    %c0_i32_1 = arith.constant 0 : i32
    return %c0_i32, %c0_i32_0 : i32, i32
  }
  func.func @transform_4(%arg0: i32) -> (i32, i32) {
    %c0_i32 = arith.constant 0 : i32
    %c0_i32_0 = arith.constant 0 : i32
    %c0_i32_1 = arith.constant 0 : i32
    return %c0_i32, %c0_i32_0 : i32, i32
  }
  func.func @transform_5(%arg0: i32) -> (i32, i32) {
    %c0_i32 = arith.constant 0 : i32
    %c0_i32_0 = arith.constant 0 : i32
    %c0_i32_1 = arith.constant 0 : i32
    return %c0_i32, %c0_i32_0 : i32, i32
  }
  func.func @transform_6(%arg0: i32) -> (i32, i32) {
    %c0_i32 = arith.constant 0 : i32
    %c0_i32_0 = arith.constant 0 : i32
    %c0_i32_1 = arith.constant 0 : i32
    return %c0_i32, %c0_i32_0 : i32, i32
  }
  func.func @transform_7(%arg0: i32) -> (i32, i32) {
    %c0_i32 = arith.constant 0 : i32
    %c0_i32_0 = arith.constant 0 : i32
    %c0_i32_1 = arith.constant 0 : i32
    return %c0_i32, %c0_i32_0 : i32, i32
  }
  func.func @transform_8(%arg0: i32) -> (i32, i32) {
    %c0_i32 = arith.constant 0 : i32
    %c0_i32_0 = arith.constant 0 : i32
    %c0_i32_1 = arith.constant 0 : i32
    return %c0_i32, %c0_i32_0 : i32, i32
  }
  func.func @transform_9(%arg0: i32) -> (i32, i32) {
    %c0_i32 = arith.constant 0 : i32
    %c0_i32_0 = arith.constant 0 : i32
    return %arg0, %c0_i32 : i32, i32
  }
}

</mosaic_0001>

<llo_original>
// kernel: net_forward.1
$region0: #{net_forward.1}
  #allocation0 [shape = 'u32[]', space=smem, size = 0x4, offset = 0x4, fixed_abs, tag = 'smem constant byte address 0x4 - core index']
  #allocation1 [shape = 'u32[144,128]{1,0:T(1,128)}', space=vmem, size = 0x12000, scoped, tag = 'internal scratch']
  %s0 = inlined_call_operand.vmem [shape: bf16[256,128], index: 0, kind: input, shape index: {}]
  %s1 = inlined_call_operand.vmem [shape: bf16[128,128], index: 1, kind: input, shape index: {}]
  %s2 = inlined_call_operand.vmem [shape: f32[1,128], index: 2, kind: input, shape index: {}]
  %s3 = inlined_call_operand.vmem [shape: bf16[128,128], index: 3, kind: input, shape index: {}]
  %s4 = inlined_call_operand.vmem [shape: f32[1,128], index: 4, kind: input, shape index: {}]
  %s5 = inlined_call_operand.vmem [shape: bf16[128,128], index: 5, kind: input, shape index: {}]
  %s6 = inlined_call_operand.vmem [shape: f32[1,128], index: 6, kind: input, shape index: {}]
  %s7 = inlined_call_operand.vmem [shape: bf16[128,128], index: 7, kind: input, shape index: {}]
  %s8 = inlined_call_operand.vmem [shape: f32[1,128], index: 8, kind: input, shape index: {}]
  %s9 = inlined_call_operand.vmem [shape: f32[256,128], index: 9, kind: output, shape index: {}]
  %s10 = sld [smem:[#allocation0]]
  $region69: #{net_forward.1} parent=0
    _
  %s12 = ssub.s32 1, %s10
  %s13 = scalar_select 0, %s12, %s10
  loop: start=0, step=1, limit=4
  $region2: #{net_forward.1} parent=0 // loop_pre_header
    _
  $region3: #{net_forward.1} parent=0 // loop_header
    %s15 = sphi 0, %s19
    %p16 = scmp.ge.s32.totalorder %s15, 4
    %s25 = sphi 0, %s27
    %s28 = sphi 0, %s25
    %s29 = sphi 0, %s28
    %s45 = sphi 0, %s29
    %s49 = sphi 0, %s49
    %s51 = sphi 0, %s49
    %s52 = sphi 0, %s51
    %s66 = sphi 0, %s52
    %s70 = sphi 0, %s70
    %s72 = sphi 0, %s70
    %s73 = sphi 0, %s72
    %s87 = sphi 0, %s73
    %s91 = sphi 0, %s91
    %s93 = sphi 0, %s91
    %s94 = sphi 0, %s93
    %s108 = sphi 0, %s94
    %s112 = sphi 0, %s112
    %s114 = sphi 0, %s112
    %s115 = sphi 0, %s114
    %s129 = sphi 0, %s115
    %s133 = sphi 0, %s133
    %s135 = sphi 0, %s133
    %s136 = sphi 0, %s135
    %s150 = sphi 0, %s136
    %s154 = sphi 0, %s154
    %s156 = sphi 0, %s154
    %s157 = sphi 0, %s156
    %s171 = sphi 0, %s157
    %s175 = sphi 0, %s175
    %s177 = sphi 0, %s175
    %s178 = sphi 0, %s177
    %s192 = sphi 0, %s178
    %s196 = sphi 0, %s196
    %s198 = sphi 0, %s196
    %s199 = sphi 0, %s198
    %s213 = sphi 0, %s199
    %s219 = sphi 0, %s221
    %s222 = sphi 0, %s219
    %s223 = sphi 0, %s222
    %s239 = sphi 0, %s223
  $region4: #{net_forward.1} parent=0 // loop_header_branch
    %18 = sbr.rel (%p16) target = $region8
  $region5: #{net_forward.1} parent=0 // loop_body
    %s20 = ssub.s32 %s15, 1
    %s21 = ssub.s32 %s15, 2
    %s22 = sadd.s32 %s15, 1
    %s23 = ssub.s32 %s15, %s22
    %p24 = scmp.eq.s32.totalorder %s23, 0
    %s26 = sadd.s32 %s25, 1
    %s27 = scalar_select %p24, %s25, %s26
    %p30 = pneg %p24
    %p31 = scmp.eq.s32.totalorder %s15, 1
    %p32 = por %p30, %p31
    %p33 = scmp.ne.s32.totalorder %s25, %s28
    %p34 = scmp.eq.s32.totalorder %s15, 0
    %p35 = por %p33, %p34
    %p36 = scmp.ne.s32.totalorder %s25, %s28
    %p37 = scmp.eq.s32.totalorder %s20, 1
    %p38 = por %p36, %p37
    %p39 = scmp.ne.s32.totalorder %s28, %s29
    %p40 = scmp.eq.s32.totalorder %s20, 0
    %p41 = por %p39, %p40
    %p42 = scmp.ne.s32.totalorder %s28, %s29
    %p43 = scmp.eq.s32.totalorder %s21, 1
    %p44 = por %p42, %p43
    %p46 = scmp.ne.s32.totalorder %s29, %s45
    %p47 = scmp.eq.s32.totalorder %s21, 0
    %p48 = por %p46, %p47
    %s50 = sadd.s32 %s49, 1
    %p53 = scmp.eq.s32.totalorder %s15, 1
    %p54 = scmp.ne.s32.totalorder %s49, %s51
    %p55 = scmp.eq.s32.totalorder %s15, 0
    %p56 = por %p54, %p55
    %p57 = scmp.ne.s32.totalorder %s49, %s51
    %p58 = scmp.eq.s32.totalorder %s20, 1
    %p59 = por %p57, %p58
    %p60 = scmp.ne.s32.totalorder %s51, %s52
    %p61 = scmp.eq.s32.totalorder %s20, 0
    %p62 = por %p60, %p61
    %p63 = scmp.ne.s32.totalorder %s51, %s52
    %p64 = scmp.eq.s32.totalorder %s21, 1
    %p65 = por %p63, %p64
    %p67 = scmp.ne.s32.totalorder %s52, %s66
    %p68 = scmp.eq.s32.totalorder %s21, 0
    %p69 = por %p67, %p68
    %s71 = sadd.s32 %s70, 1
    %p74 = scmp.eq.s32.totalorder %s15, 1
    %p75 = scmp.ne.s32.totalorder %s70, %s72
    %p76 = scmp.eq.s32.totalorder %s15, 0
    %p77 = por %p75, %p76
    %p78 = scmp.ne.s32.totalorder %s70, %s72
    %p79 = scmp.eq.s32.totalorder %s20, 1
    %p80 = por %p78, %p79
    %p81 = scmp.ne.s32.totalorder %s72, %s73
    %p82 = scmp.eq.s32.totalorder %s20, 0
    %p83 = por %p81, %p82
    %p84 = scmp.ne.s32.totalorder %s72, %s73
    %p85 = scmp.eq.s32.totalorder %s21, 1
    %p86 = por %p84, %p85
    %p88 = scmp.ne.s32.totalorder %s73, %s87
    %p89 = scmp.eq.s32.totalorder %s21, 0
    %p90 = por %p88, %p89
    %s92 = sadd.s32 %s91, 1
    %p95 = scmp.eq.s32.totalorder %s15, 1
    %p96 = scmp.ne.s32.totalorder %s91, %s93
    %p97 = scmp.eq.s32.totalorder %s15, 0
    %p98 = por %p96, %p97
    %p99 = scmp.ne.s32.totalorder %s91, %s93
    %p100 = scmp.eq.s32.totalorder %s20, 1
    %p101 = por %p99, %p100
    %p102 = scmp.ne.s32.totalorder %s93, %s94
    %p103 = scmp.eq.s32.totalorder %s20, 0
    %p104 = por %p102, %p103
    %p105 = scmp.ne.s32.totalorder %s93, %s94
    %p106 = scmp.eq.s32.totalorder %s21, 1
    %p107 = por %p105, %p106
    %p109 = scmp.ne.s32.totalorder %s94, %s108
    %p110 = scmp.eq.s32.totalorder %s21, 0
    %p111 = por %p109, %p110
    %s113 = sadd.s32 %s112, 1
    %p116 = scmp.eq.s32.totalorder %s15, 1
    %p117 = scmp.ne.s32.totalorder %s112, %s114
    %p118 = scmp.eq.s32.totalorder %s15, 0
    %p119 = por %p117, %p118
    %p120 = scmp.ne.s32.totalorder %s112, %s114
    %p121 = scmp.eq.s32.totalorder %s20, 1
    %p122 = por %p120, %p121
    %p123 = scmp.ne.s32.totalorder %s114, %s115
    %p124 = scmp.eq.s32.totalorder %s20, 0
    %p125 = por %p123, %p124
    %p126 = scmp.ne.s32.totalorder %s114, %s115
    %p127 = scmp.eq.s32.totalorder %s21, 1
    %p128 = por %p126, %p127
    %p130 = scmp.ne.s32.totalorder %s115, %s129
    %p131 = scmp.eq.s32.totalorder %s21, 0
    %p132 = por %p130, %p131
    %s134 = sadd.s32 %s133, 1
    %p137 = scmp.eq.s32.totalorder %s15, 1
    %p138 = scmp.ne.s32.totalorder %s133, %s135
    %p139 = scmp.eq.s32.totalorder %s15, 0
    %p140 = por %p138, %p139
    %p141 = scmp.ne.s32.totalorder %s133, %s135
    %p142 = scmp.eq.s32.totalorder %s20, 1
    %p143 = por %p141, %p142
    %p144 = scmp.ne.s32.totalorder %s135, %s136
    %p145 = scmp.eq.s32.totalorder %s20, 0
    %p146 = por %p144, %p145
    %p147 = scmp.ne.s32.totalorder %s135, %s136
    %p148 = scmp.eq.s32.totalorder %s21, 1
    %p149 = por %p147, %p148
    %p151 = scmp.ne.s32.totalorder %s136, %s150
    %p152 = scmp.eq.s32.totalorder %s21, 0
    %p153 = por %p151, %p152
    %s155 = sadd.s32 %s154, 1
    %p158 = scmp.eq.s32.totalorder %s15, 1
    %p159 = scmp.ne.s32.totalorder %s154, %s156
    %p160 = scmp.eq.s32.totalorder %s15, 0
    %p161 = por %p159, %p160
    %p162 = scmp.ne.s32.totalorder %s154, %s156
    %p163 = scmp.eq.s32.totalorder %s20, 1
    %p164 = por %p162, %p163
    %p165 = scmp.ne.s32.totalorder %s156, %s157
    %p166 = scmp.eq.s32.totalorder %s20, 0
    %p167 = por %p165, %p166
    %p168 = scmp.ne.s32.totalorder %s156, %s157
    %p169 = scmp.eq.s32.totalorder %s21, 1
    %p170 = por %p168, %p169
    %p172 = scmp.ne.s32.totalorder %s157, %s171
    %p173 = scmp.eq.s32.totalorder %s21, 0
    %p174 = por %p172, %p173
    %s176 = sadd.s32 %s175, 1
    %p179 = scmp.eq.s32.totalorder %s15, 1
    %p180 = scmp.ne.s32.totalorder %s175, %s177
    %p181 = scmp.eq.s32.totalorder %s15, 0
    %p182 = por %p180, %p181
    %p183 = scmp.ne.s32.totalorder %s175, %s177
    %p184 = scmp.eq.s32.totalorder %s20, 1
    %p185 = por %p183, %p184
    %p186 = scmp.ne.s32.totalorder %s177, %s178
    %p187 = scmp.eq.s32.totalorder %s20, 0
    %p188 = por %p186, %p187
    %p189 = scmp.ne.s32.totalorder %s177, %s178
    %p190 = scmp.eq.s32.totalorder %s21, 1
    %p191 = por %p189, %p190
    %p193 = scmp.ne.s32.totalorder %s178, %s192
    %p194 = scmp.eq.s32.totalorder %s21, 0
    %p195 = por %p193, %p194
    %s197 = sadd.s32 %s196, 1
    %p200 = scmp.eq.s32.totalorder %s15, 1
    %p201 = scmp.ne.s32.totalorder %s196, %s198
    %p202 = scmp.eq.s32.totalorder %s15, 0
    %p203 = por %p201, %p202
    %p204 = scmp.ne.s32.totalorder %s196, %s198
    %p205 = scmp.eq.s32.totalorder %s20, 1
    %p206 = por %p204, %p205
    %p207 = scmp.ne.s32.totalorder %s198, %s199
    %p208 = scmp.eq.s32.totalorder %s20, 0
    %p209 = por %p207, %p208
    %p210 = scmp.ne.s32.totalorder %s198, %s199
    %p211 = scmp.eq.s32.totalorder %s21, 1
    %p212 = por %p210, %p211
    %p214 = scmp.ne.s32.totalorder %s199, %s213
    %p215 = scmp.eq.s32.totalorder %s21, 0
    %p216 = por %p214, %p215
    %s217 = ssub.s32 %s15, %s22
    %p218 = scmp.eq.s32.totalorder %s217, 0
    %s220 = sadd.s32 %s219, 1
    %s221 = scalar_select %p218, %s219, %s220
    %p224 = pneg %p218
    %p225 = scmp.eq.s32.totalorder %s15, 1
    %p226 = por %p224, %p225
    %p227 = scmp.ne.s32.totalorder %s219, %s222
    %p228 = scmp.eq.s32.totalorder %s15, 0
    %p229 = por %p227, %p228
    %p230 = scmp.ne.s32.totalorder %s219, %s222
    %p231 = scmp.eq.s32.totalorder %s20, 1
    %p232 = por %p230, %p231
    %p233 = scmp.ne.s32.totalorder %s222, %s223
    %p234 = scmp.eq.s32.totalorder %s20, 0
    %p235 = por %p233, %p234
    %p236 = scmp.ne.s32.totalorder %s222, %s223
    %p237 = scmp.eq.s32.totalorder %s21, 1
    %p238 = por %p236, %p237
    %p240 = scmp.ne.s32.totalorder %s223, %s239
    %p241 = scmp.eq.s32.totalorder %s21, 0
    %p242 = por %p240, %p241
    %p243 = scmp.le.s32.totalorder 1, %s15
    %p244 = scmp.lt.s32.totalorder %s15, 3
    %p245 = pnand %p243, %p244
    %p246 = pneg %p245
    // Predicated region
    $region9: #{net_forward.1} parent=5 // pred_check
      _
    $region10: #{net_forward.1} parent=5 // pred_check_branch
      %248 = sbr.rel (%p245) target = $region12
    $region11: #{net_forward.1} parent=5 // pred_region
      %s249 = ssub.s32 %s15, 1
      // Predicated region
      $region13: #{net_forward.1} parent=11 // pred_check
        %p250 = pneg %p62
      $region14: #{net_forward.1} parent=11 // pred_check_branch
        %252 = sbr.rel (%p250) target = $region16
      $region15: #{net_forward.1} parent=11 // pred_region
        _
      $region16: #{net_forward.1} parent=11 // pred_fallthru
        _
      // Predicated region
      $region17: #{net_forward.1} parent=11 // pred_check
        %p253 = pneg %p83
      $region18: #{net_forward.1} parent=11 // pred_check_branch
        %255 = sbr.rel (%p253) target = $region20
      $region19: #{net_forward.1} parent=11 // pred_region
        _
      $region20: #{net_forward.1} parent=11 // pred_fallthru
        _
      // Predicated region
      $region21: #{net_forward.1} parent=11 // pred_check
        %p256 = pneg %p104
      $region22: #{net_forward.1} parent=11 // pred_check_branch
        %258 = sbr.rel (%p256) target = $region24
      $region23: #{net_forward.1} parent=11 // pred_region
        _
      $region24: #{net_forward.1} parent=11 // pred_fallthru
        _
      // Predicated region
      $region25: #{net_forward.1} parent=11 // pred_check
        %p259 = pneg %p125
      $region26: #{net_forward.1} parent=11 // pred_check_branch
        %261 = sbr.rel (%p259) target = $region28
      $region27: #{net_forward.1} parent=11 // pred_region
        _
      $region28: #{net_forward.1} parent=11 // pred_fallthru
        _
      // Predicated region
      $region29: #{net_forward.1} parent=11 // pred_check
        %p262 = pneg %p146
      $region30: #{net_forward.1} parent=11 // pred_check_branch
        %264 = sbr.rel (%p262) target = $region32
      $region31: #{net_forward.1} parent=11 // pred_region
        _
      $region32: #{net_forward.1} parent=11 // pred_fallthru
        _
      // Predicated region
      $region33: #{net_forward.1} parent=11 // pred_check
        %p265 = pneg %p167
      $region34: #{net_forward.1} parent=11 // pred_check_branch
        %267 = sbr.rel (%p265) target = $region36
      $region35: #{net_forward.1} parent=11 // pred_region
        _
      $region36: #{net_forward.1} parent=11 // pred_fallthru
        _
      // Predicated region
      $region37: #{net_forward.1} parent=11 // pred_check
        %p268 = pneg %p188
      $region38: #{net_forward.1} parent=11 // pred_check_branch
        %270 = sbr.rel (%p268) target = $region40
      $region39: #{net_forward.1} parent=11 // pred_region
        _
      $region40: #{net_forward.1} parent=11 // pred_fallthru
        _
      // Predicated region
      $region41: #{net_forward.1} parent=11 // pred_check
        %p271 = pneg %p209
      $region42: #{net_forward.1} parent=11 // pred_check_branch
        %273 = sbr.rel (%p271) target = $region44
      $region43: #{net_forward.1} parent=11 // pred_region
        _
      $region44: #{net_forward.1} parent=11 // pred_fallthru
        _
    $region12: #{net_forward.1} parent=5 // pred_fallthru
      _
    %p274 = scmp.lt.s32.totalorder %s15, 2
    // Predicated region
    $region45: #{net_forward.1} parent=5 // pred_check
      %p275 = pneg %p274
    $region46: #{net_forward.1} parent=5 // pred_check_branch
      %277 = sbr.rel (%p275) target = $region48
    $region47: #{net_forward.1} parent=5 // pred_region
      // Predicated region
      $region49: #{net_forward.1} parent=47 // pred_check
        %p278 = pneg %p35
      $region50: #{net_forward.1} parent=47 // pred_check_branch
        %280 = sbr.rel (%p278) target = $region52
      $region51: #{net_forward.1} parent=47 // pred_region
        %s281 = smul.u32 16, %s15
        %p282 = scmp.lt.s32.totalorder %s281, 31
        %s283 = scalar_select %p282, %s281, 31
        %s284 = smul.addr %s283, 4
        %s285 = scalar_lea.vmem %s0, %s284
        %s286 = smul.u32 16, %s15
      $region52: #{net_forward.1} parent=47 // pred_fallthru
        _
    $region48: #{net_forward.1} parent=5 // pred_fallthru
      _
    %p287 = scmp.le.s32.totalorder 1, %s15
    %p288 = scmp.lt.s32.totalorder %s15, 3
    %p289 = pnand %p287, %p288
    %p290 = pneg %p289
    // Predicated region
    $region53: #{net_forward.1} parent=5 // pred_check
      _
    $region54: #{net_forward.1} parent=5 // pred_check_branch
      %292 = sbr.rel (%p289) target = $region56
    $region55: #{net_forward.1} parent=5 // pred_region
      %s293 = ssub.s32 %s15, 1
      %s294 = smul.u32 16, %s20
      %p295 = scmp.lt.s32.totalorder %s294, 31
      %s296 = scalar_select %p295, %s294, 31
      %s297 = smul.addr %s296, 4
      %s298 = scalar_lea.vmem %s0, %s297
      %p299 = pneg %p41
      %p300 = pneg %p38
      %p301 = pneg %p62
      %p302 = pneg %p59
      %p303 = pneg %p83
      %p304 = pneg %p80
      %p305 = pneg %p104
      %p306 = pneg %p101
      %p307 = pneg %p125
      %p308 = pneg %p122
      %p309 = pneg %p146
      %p310 = pneg %p143
      %p311 = pneg %p167
      %p312 = pneg %p164
      %p313 = pneg %p188
      %p314 = pneg %p185
      %p315 = pneg %p209
      %p316 = pneg %p206
      %p317 = pneg %p235
      %p318 = pneg %p232
      %s319 = smul.u32 16, %s20
      %p320 = scmp.lt.s32.totalorder %s319, 31
      %s321 = scalar_select %p320, %s319, 31
      %s322 = smul.addr %s321, 8
      %s323 = scalar_lea.vmem %s9, %s322
      %s324 = smul.u32 16, %s20
      %p325 = scmp.lt.s32.totalorder %s324, 31
      %s326 = scalar_select %p325, %s324, 31
      %s327 = smul.addr %s326, 4
      %s328 = scalar_lea.vmem %s0, %s327
      %s329 = smul.u32 16, %s20
      %s330 = smul.u32 16, %s20
      %p331 = scmp.lt.s32.totalorder %s330, 31
      %s332 = scalar_select %p331, %s330, 31
      %s333 = smul.addr %s332, 8
      %s334 = scalar_lea.vmem %s9, %s333
      %s335 = smul.u32 16, %s20
      %v337 = vld [vmem:[%s328] sm:$0xf]
      %v338 = vld [vmem:[%s328 + $0x4] sm:$0xf]
      %v339 = vld [vmem:[%s328 + $0x8] sm:$0xf]
      %v340 = vld [vmem:[%s328 + $0xc] sm:$0xf]
      %v341 = vld [vmem:[%s328 + $0x10] sm:$0xf]
      %v342 = vld [vmem:[%s328 + $0x14] sm:$0xf]
      %v343 = vld [vmem:[%s328 + $0x18] sm:$0xf]
      %v344 = vld [vmem:[%s328 + $0x1c] sm:$0xf]
      %v345 = vld [vmem:[%s328 + $0x20] sm:$0xf]
      %v346 = vld [vmem:[%s328 + $0x24] sm:$0xf]
      %v347 = vld [vmem:[%s328 + $0x28] sm:$0xf]
      %v348 = vld [vmem:[%s328 + $0x2c] sm:$0xf]
      %v349 = vld [vmem:[%s328 + $0x30] sm:$0xf]
      %v350 = vld [vmem:[%s328 + $0x34] sm:$0xf]
      %v351 = vld [vmem:[%s328 + $0x38] sm:$0xf]
      %v352 = vld [vmem:[%s328 + $0x3c] sm:$0xf]
      %v353 = vld [vmem:[%s1] sm:$0xf]
      %v354 = vld [vmem:[%s1 + $0x4] sm:$0xf]
      %v355 = vld [vmem:[%s1 + $0x8] sm:$0xf]
      %v356 = vld [vmem:[%s1 + $0xc] sm:$0xf]
      %v357 = vld [vmem:[%s1 + $0x10] sm:$0xf]
      %v358 = vld [vmem:[%s1 + $0x14] sm:$0xf]
      %v359 = vld [vmem:[%s1 + $0x18] sm:$0xf]
      %v360 = vld [vmem:[%s1 + $0x1c] sm:$0xf]
      %v361 = vld [vmem:[%s1 + $0x20] sm:$0xf]
      %v362 = vld [vmem:[%s1 + $0x24] sm:$0xf]
      %v363 = vld [vmem:[%s1 + $0x28] sm:$0xf]
      %v364 = vld [vmem:[%s1 + $0x2c] sm:$0xf]
      %v365 = vld [vmem:[%s1 + $0x30] sm:$0xf]
      %v366 = vld [vmem:[%s1 + $0x34] sm:$0xf]
      %v367 = vld [vmem:[%s1 + $0x38] sm:$0xf]
      %v368 = vld [vmem:[%s1 + $0x3c] sm:$0xf]
      %v369 = vld [vmem:[%s2] sm:$0x1]
      %v371 = vlaneseq
      %v372 = vshrl.u32 %v371, 7
      %v373 = vsub.s32 0, %v372
      %v374 = vrot.slane %v369, %v373
      %v392 = vunpack.c.l.b16 %v337
      %v393 = vunpack.c.l.b16 %v338
      %v394 = vunpack.c.l.b16 %v339
      %v395 = vunpack.c.l.b16 %v340
      %v396 = vunpack.c.l.b16 %v341
      %v397 = vunpack.c.l.b16 %v342
      %v398 = vunpack.c.l.b16 %v343
      %v399 = vunpack.c.l.b16 %v344
      %v400 = vunpack.c.l.b16 %v345
      %v401 = vunpack.c.l.b16 %v346
      %v402 = vunpack.c.l.b16 %v347
      %v403 = vunpack.c.l.b16 %v348
      %v404 = vunpack.c.l.b16 %v349
      %v405 = vunpack.c.l.b16 %v350
      %v406 = vunpack.c.l.b16 %v351
      %v407 = vunpack.c.l.b16 %v352
      %v408 = vpack.c.b16 %v393, %v392
      %v409 = vpack.c.b16 %v395, %v394
      %v410 = vpack.c.b16 %v397, %v396
      %v411 = vpack.c.b16 %v399, %v398
      %v412 = vpack.c.b16 %v401, %v400
      %v413 = vpack.c.b16 %v403, %v402
      %v414 = vpack.c.b16 %v405, %v404
      %v415 = vpack.c.b16 %v407, %v406
      %v440 = vunpack.c.l.b16 %v353
      %v441 = vunpack.c.l.b16 %v354
      %v442 = vunpack.c.l.b16 %v355
      %v443 = vunpack.c.l.b16 %v356
      %v444 = vunpack.c.l.b16 %v357
      %v445 = vunpack.c.l.b16 %v358
      %v446 = vunpack.c.l.b16 %v359
      %v447 = vunpack.c.l.b16 %v360
      %v448 = vunpack.c.l.b16 %v361
      %v449 = vunpack.c.l.b16 %v362
      %v450 = vunpack.c.l.b16 %v363
      %v451 = vunpack.c.l.b16 %v364
      %v452 = vunpack.c.l.b16 %v365
      %v453 = vunpack.c.l.b16 %v366
      %v454 = vunpack.c.l.b16 %v367
      %v455 = vunpack.c.l.b16 %v368
      %v456 = vpack.c.b16 %v441, %v440
      %v457 = vpack.c.b16 %v443, %v442
      %v458 = vpack.c.b16 %v445, %v444
      %v459 = vpack.c.b16 %v447, %v446
      %v460 = vpack.c.b16 %v449, %v448
      %v461 = vpack.c.b16 %v451, %v450
      %v462 = vpack.c.b16 %v453, %v452
      %v463 = vpack.c.b16 %v455, %v454
      %472 = vmatprep.subr.bf16.mxu0 0
      %473 = vmatpush1.bf16.msra.mxu0 %v463
      %474 = vmatprep.subr.bf16.mxu0 0
      %475 = vmatpush1.bf16.msra.mxu0 %v462
      %476 = vmatprep.subr.bf16.mxu0 0
      %477 = vmatpush1.bf16.msra.mxu0 %v461
      %478 = vmatprep.subr.bf16.mxu0 0
      %479 = vmatpush1.bf16.msra.mxu0 %v460
      %480 = vmatprep.subr.bf16.mxu0 0
      %481 = vmatpush1.bf16.msra.mxu0 %v459
      %482 = vmatprep.subr.bf16.mxu0 0
      %483 = vmatpush1.bf16.msra.mxu0 %v458
      %484 = vmatprep.subr.bf16.mxu0 0
      %485 = vmatpush1.bf16.msra.mxu0 %v457
      %486 = vmatprep.subr.bf16.mxu0 0
      %487 = vmatpush1.bf16.msra.mxu0 %v456
      %488 = vmatprep.subr.bf16.mxu0 0
      %489 = vmatpush2.bf16.msra.mxu0 0
      %490 = vmatprep.subr.bf16.mxu0 0
      %491 = vmatpush2.bf16.msra.mxu0 0
      %492 = vmatprep.subr.bf16.mxu0 0
      %493 = vmatpush2.bf16.msra.mxu0 0
      %494 = vmatprep.subr.bf16.mxu0 0
      %495 = vmatpush2.bf16.msra.mxu0 0
      %496 = vmatprep.subr.bf16.mxu0 0
      %497 = vmatpush2.bf16.msra.mxu0 0
      %498 = vmatprep.subr.bf16.mxu0 0
      %499 = vmatpush2.bf16.msra.mxu0 0
      %500 = vmatprep.subr.bf16.mxu0 0
      %501 = vmatpush2.bf16.msra.mxu0 0
      %502 = vmatprep.subr.bf16.mxu0 0
      %503 = vmatpush2.bf16.msra.mxu0 0
      %504 = vmatprep.mubr.bf16.mxu0 0
      %505 = vmatmul.mubr.bf16.gmra.mxu0 %v408
      %v506 = vpop.f32.mrf.mxu0
      %v507 = vadd.f32 %v374, %v506
      %v508 = vpop.f32.mrf.mxu0
      %v509 = vpop.f32.mrf.mxu0
      %v510 = vadd.f32 %v374, %v509
      %v511 = vpop.f32.mrf.mxu0
      %512 = vmatprep.mubr.bf16.mxu0 0
      %513 = vmatmul.mubr.bf16.gmra.mxu0 %v409
      %v514 = vpop.f32.mrf.mxu0
      %v515 = vadd.f32 %v374, %v514
      %v516 = vpop.f32.mrf.mxu0
      %v517 = vpop.f32.mrf.mxu0
      %v518 = vadd.f32 %v374, %v517
      %v519 = vpop.f32.mrf.mxu0
      %520 = vmatprep.mubr.bf16.mxu0 0
      %521 = vmatmul.mubr.bf16.gmra.mxu0 %v410
      %v522 = vpop.f32.mrf.mxu0
      %v523 = vadd.f32 %v374, %v522
      %v524 = vpop.f32.mrf.mxu0
      %v525 = vpop.f32.mrf.mxu0
      %v526 = vadd.f32 %v374, %v525
      %v527 = vpop.f32.mrf.mxu0
      %528 = vmatprep.mubr.bf16.mxu0 0
      %529 = vmatmul.mubr.bf16.gmra.mxu0 %v411
      %v530 = vpop.f32.mrf.mxu0
      %v531 = vadd.f32 %v374, %v530
      %v532 = vpop.f32.mrf.mxu0
      %v533 = vpop.f32.mrf.mxu0
      %v534 = vadd.f32 %v374, %v533
      %v535 = vpop.f32.mrf.mxu0
      %536 = vmatprep.mubr.bf16.mxu0 0
      %537 = vmatmul.mubr.bf16.gmra.mxu0 %v412
      %v538 = vpop.f32.mrf.mxu0
      %v539 = vadd.f32 %v374, %v538
      %v540 = vpop.f32.mrf.mxu0
      %v541 = vpop.f32.mrf.mxu0
      %v542 = vadd.f32 %v374, %v541
      %v543 = vpop.f32.mrf.mxu0
      %544 = vmatprep.mubr.bf16.mxu0 0
      %545 = vmatmul.mubr.bf16.gmra.mxu0 %v413
      %v546 = vpop.f32.mrf.mxu0
      %v547 = vadd.f32 %v374, %v546
      %v548 = vpop.f32.mrf.mxu0
      %v549 = vpop.f32.mrf.mxu0
      %v550 = vadd.f32 %v374, %v549
      %v551 = vpop.f32.mrf.mxu0
      %552 = vmatprep.mubr.bf16.mxu0 0
      %553 = vmatmul.mubr.bf16.gmra.mxu0 %v414
      %v554 = vpop.f32.mrf.mxu0
      %v555 = vadd.f32 %v374, %v554
      %v556 = vpop.f32.mrf.mxu0
      %v557 = vpop.f32.mrf.mxu0
      %v558 = vadd.f32 %v374, %v557
      %v559 = vpop.f32.mrf.mxu0
      %560 = vmatprep.mubr.bf16.mxu0 0
      %561 = vmatmul.mubr.bf16.gmra.mxu0 %v415
      %v562 = vpop.f32.mrf.mxu0
      %v563 = vadd.f32 %v374, %v562
      %v564 = vpop.f32.mrf.mxu0
      %v565 = vpop.f32.mrf.mxu0
      %v566 = vadd.f32 %v374, %v565
      %v567 = vpop.f32.mrf.mxu0
      %568 = vdwg.mxu0
      %v569 = vmax.f32 %v507, 0.0
      %v570 = vmax.f32 %v510, 0.0
      %v571 = vmax.f32 %v515, 0.0
      %v572 = vmax.f32 %v518, 0.0
      %v573 = vmax.f32 %v523, 0.0
      %v574 = vmax.f32 %v526, 0.0
      %v575 = vmax.f32 %v531, 0.0
      %v576 = vmax.f32 %v534, 0.0
      %v577 = vmax.f32 %v539, 0.0
      %v578 = vmax.f32 %v542, 0.0
      %v579 = vmax.f32 %v547, 0.0
      %v580 = vmax.f32 %v550, 0.0
      %v581 = vmax.f32 %v555, 0.0
      %v582 = vmax.f32 %v558, 0.0
      %v583 = vmax.f32 %v563, 0.0
      %v584 = vmax.f32 %v566, 0.0
      %v585 = vpack.c.bf16 %v570, %v569
      %v586 = vpack.c.bf16 %v572, %v571
      %v587 = vpack.c.bf16 %v574, %v573
      %v588 = vpack.c.bf16 %v576, %v575
      %v589 = vpack.c.bf16 %v578, %v577
      %v590 = vpack.c.bf16 %v580, %v579
      %v591 = vpack.c.bf16 %v582, %v581
      %v592 = vpack.c.bf16 %v584, %v583
      %v593 = vld [vmem:[%s3] sm:$0xf]
      %v594 = vld [vmem:[%s3 + $0x4] sm:$0xf]
      %v595 = vld [vmem:[%s3 + $0x8] sm:$0xf]
      %v596 = vld [vmem:[%s3 + $0xc] sm:$0xf]
      %v597 = vld [vmem:[%s3 + $0x10] sm:$0xf]
      %v598 = vld [vmem:[%s3 + $0x14] sm:$0xf]
      %v599 = vld [vmem:[%s3 + $0x18] sm:$0xf]
      %v600 = vld [vmem:[%s3 + $0x1c] sm:$0xf]
      %v601 = vld [vmem:[%s3 + $0x20] sm:$0xf]
      %v602 = vld [vmem:[%s3 + $0x24] sm:$0xf]
      %v603 = vld [vmem:[%s3 + $0x28] sm:$0xf]
      %v604 = vld [vmem:[%s3 + $0x2c] sm:$0xf]
      %v605 = vld [vmem:[%s3 + $0x30] sm:$0xf]
      %v606 = vld [vmem:[%s3 + $0x34] sm:$0xf]
      %v607 = vld [vmem:[%s3 + $0x38] sm:$0xf]
      %v608 = vld [vmem:[%s3 + $0x3c] sm:$0xf]
      %v609 = vld [vmem:[%s4] sm:$0x1]
      %v611 = vlaneseq
      %v612 = vshrl.u32 %v611, 7
      %v613 = vsub.s32 0, %v612
      %v614 = vrot.slane %v609, %v613
      %v632 = vunpack.c.l.b16 %v593
      %v633 = vunpack.c.l.b16 %v594
      %v634 = vunpack.c.l.b16 %v595
      %v635 = vunpack.c.l.b16 %v596
      %v636 = vunpack.c.l.b16 %v597
      %v637 = vunpack.c.l.b16 %v598
      %v638 = vunpack.c.l.b16 %v599
      %v639 = vunpack.c.l.b16 %v600
      %v640 = vunpack.c.l.b16 %v601
      %v641 = vunpack.c.l.b16 %v602
      %v642 = vunpack.c.l.b16 %v603
      %v643 = vunpack.c.l.b16 %v604
      %v644 = vunpack.c.l.b16 %v605
      %v645 = vunpack.c.l.b16 %v606
      %v646 = vunpack.c.l.b16 %v607
      %v647 = vunpack.c.l.b16 %v608
      %v648 = vpack.c.b16 %v633, %v632
      %v649 = vpack.c.b16 %v635, %v634
      %v650 = vpack.c.b16 %v637, %v636
      %v651 = vpack.c.b16 %v639, %v638
      %v652 = vpack.c.b16 %v641, %v640
      %v653 = vpack.c.b16 %v643, %v642
      %v654 = vpack.c.b16 %v645, %v644
      %v655 = vpack.c.b16 %v647, %v646
      %664 = vmatprep.subr.bf16.mxu0 0
      %665 = vmatpush1.bf16.msra.mxu0 %v655
      %666 = vmatprep.subr.bf16.mxu0 0
      %667 = vmatpush1.bf16.msra.mxu0 %v654
      %668 = vmatprep.subr.bf16.mxu0 0
      %669 = vmatpush1.bf16.msra.mxu0 %v653
      %670 = vmatprep.subr.bf16.mxu0 0
      %671 = vmatpush1.bf16.msra.mxu0 %v652
      %672 = vmatprep.subr.bf16.mxu0 0
      %673 = vmatpush1.bf16.msra.mxu0 %v651
      %674 = vmatprep.subr.bf16.mxu0 0
      %675 = vmatpush1.bf16.msra.mxu0 %v650
      %676 = vmatprep.subr.bf16.mxu0 0
      %677 = vmatpush1.bf16.msra.mxu0 %v649
      %678 = vmatprep.subr.bf16.mxu0 0
      %679 = vmatpush1.bf16.msra.mxu0 %v648
      %680 = vmatprep.subr.bf16.mxu0 0
      %681 = vmatpush2.bf16.msra.mxu0 0
      %682 = vmatprep.subr.bf16.mxu0 0
      %683 = vmatpush2.bf16.msra.mxu0 0
      %684 = vmatprep.subr.bf16.mxu0 0
      %685 = vmatpush2.bf16.msra.mxu0 0
      %686 = vmatprep.subr.bf16.mxu0 0
      %687 = vmatpush2.bf16.msra.mxu0 0
      %688 = vmatprep.subr.bf16.mxu0 0
      %689 = vmatpush2.bf16.msra.mxu0 0
      %690 = vmatprep.subr.bf16.mxu0 0
      %691 = vmatpush2.bf16.msra.mxu0 0
      %692 = vmatprep.subr.bf16.mxu0 0
      %693 = vmatpush2.bf16.msra.mxu0 0
      %694 = vmatprep.subr.bf16.mxu0 0
      %695 = vmatpush2.bf16.msra.mxu0 0
      %696 = vmatprep.mubr.bf16.mxu0 0
      %697 = vmatmul.mubr.bf16.gmra.mxu0 %v585
      %v698 = vpop.f32.mrf.mxu0
      %v699 = vadd.f32 %v614, %v698
      %v700 = vpop.f32.mrf.mxu0
      %v701 = vpop.f32.mrf.mxu0
      %v702 = vadd.f32 %v614, %v701
      %v703 = vpop.f32.mrf.mxu0
      %704 = vmatprep.mubr.bf16.mxu0 0
      %705 = vmatmul.mubr.bf16.gmra.mxu0 %v586
      %v706 = vpop.f32.mrf.mxu0
      %v707 = vadd.f32 %v614, %v706
      %v708 = vpop.f32.mrf.mxu0
      %v709 = vpop.f32.mrf.mxu0
      %v710 = vadd.f32 %v614, %v709
      %v711 = vpop.f32.mrf.mxu0
      %712 = vmatprep.mubr.bf16.mxu0 0
      %713 = vmatmul.mubr.bf16.gmra.mxu0 %v587
      %v714 = vpop.f32.mrf.mxu0
      %v715 = vadd.f32 %v614, %v714
      %v716 = vpop.f32.mrf.mxu0
      %v717 = vpop.f32.mrf.mxu0
      %v718 = vadd.f32 %v614, %v717
      %v719 = vpop.f32.mrf.mxu0
      %720 = vmatprep.mubr.bf16.mxu0 0
      %721 = vmatmul.mubr.bf16.gmra.mxu0 %v588
      %v722 = vpop.f32.mrf.mxu0
      %v723 = vadd.f32 %v614, %v722
      %v724 = vpop.f32.mrf.mxu0
      %v725 = vpop.f32.mrf.mxu0
      %v726 = vadd.f32 %v614, %v725
      %v727 = vpop.f32.mrf.mxu0
      %728 = vmatprep.mubr.bf16.mxu0 0
      %729 = vmatmul.mubr.bf16.gmra.mxu0 %v589
      %v730 = vpop.f32.mrf.mxu0
      %v731 = vadd.f32 %v614, %v730
      %v732 = vpop.f32.mrf.mxu0
      %v733 = vpop.f32.mrf.mxu0
      %v734 = vadd.f32 %v614, %v733
      %v735 = vpop.f32.mrf.mxu0
      %736 = vmatprep.mubr.bf16.mxu0 0
      %737 = vmatmul.mubr.bf16.gmra.mxu0 %v590
      %v738 = vpop.f32.mrf.mxu0
      %v739 = vadd.f32 %v614, %v738
      %v740 = vpop.f32.mrf.mxu0
      %v741 = vpop.f32.mrf.mxu0
      %v742 = vadd.f32 %v614, %v741
      %v743 = vpop.f32.mrf.mxu0
      %744 = vmatprep.mubr.bf16.mxu0 0
      %745 = vmatmul.mubr.bf16.gmra.mxu0 %v591
      %v746 = vpop.f32.mrf.mxu0
      %v747 = vadd.f32 %v614, %v746
      %v748 = vpop.f32.mrf.mxu0
      %v749 = vpop.f32.mrf.mxu0
      %v750 = vadd.f32 %v614, %v749
      %v751 = vpop.f32.mrf.mxu0
      %752 = vmatprep.mubr.bf16.mxu0 0
      %753 = vmatmul.mubr.bf16.gmra.mxu0 %v592
      %v754 = vpop.f32.mrf.mxu0
      %v755 = vadd.f32 %v614, %v754
      %v756 = vpop.f32.mrf.mxu0
      %v757 = vpop.f32.mrf.mxu0
      %v758 = vadd.f32 %v614, %v757
      %v759 = vpop.f32.mrf.mxu0
      %760 = vdwg.mxu0
      %v761 = vmax.f32 %v699, 0.0
      %v762 = vmax.f32 %v702, 0.0
      %v763 = vmax.f32 %v707, 0.0
      %v764 = vmax.f32 %v710, 0.0
      %v765 = vmax.f32 %v715, 0.0
      %v766 = vmax.f32 %v718, 0.0
      %v767 = vmax.f32 %v723, 0.0
      %v768 = vmax.f32 %v726, 0.0
      %v769 = vmax.f32 %v731, 0.0
      %v770 = vmax.f32 %v734, 0.0
      %v771 = vmax.f32 %v739, 0.0
      %v772 = vmax.f32 %v742, 0.0
      %v773 = vmax.f32 %v747, 0.0
      %v774 = vmax.f32 %v750, 0.0
      %v775 = vmax.f32 %v755, 0.0
      %v776 = vmax.f32 %v758, 0.0
      %v777 = vpack.c.bf16 %v762, %v761
      %v778 = vpack.c.bf16 %v764, %v763
      %v779 = vpack.c.bf16 %v766, %v765
      %v780 = vpack.c.bf16 %v768, %v767
      %v781 = vpack.c.bf16 %v770, %v769
      %v782 = vpack.c.bf16 %v772, %v771
      %v783 = vpack.c.bf16 %v774, %v773
      %v784 = vpack.c.bf16 %v776, %v775
      %v785 = vld [vmem:[%s5] sm:$0xf]
      %v786 = vld [vmem:[%s5 + $0x4] sm:$0xf]
      %v787 = vld [vmem:[%s5 + $0x8] sm:$0xf]
      %v788 = vld [vmem:[%s5 + $0xc] sm:$0xf]
      %v789 = vld [vmem:[%s5 + $0x10] sm:$0xf]
      %v790 = vld [vmem:[%s5 + $0x14] sm:$0xf]
      %v791 = vld [vmem:[%s5 + $0x18] sm:$0xf]
      %v792 = vld [vmem:[%s5 + $0x1c] sm:$0xf]
      %v793 = vld [vmem:[%s5 + $0x20] sm:$0xf]
      %v794 = vld [vmem:[%s5 + $0x24] sm:$0xf]
      %v795 = vld [vmem:[%s5 + $0x28] sm:$0xf]
      %v796 = vld [vmem:[%s5 + $0x2c] sm:$0xf]
      %v797 = vld [vmem:[%s5 + $0x30] sm:$0xf]
      %v798 = vld [vmem:[%s5 + $0x34] sm:$0xf]
      %v799 = vld [vmem:[%s5 + $0x38] sm:$0xf]
      %v800 = vld [vmem:[%s5 + $0x3c] sm:$0xf]
      %v801 = vld [vmem:[%s6] sm:$0x1]
      %v803 = vlaneseq
      %v804 = vshrl.u32 %v803, 7
      %v805 = vsub.s32 0, %v804
      %v806 = vrot.slane %v801, %v805
      %v824 = vunpack.c.l.b16 %v785
      %v825 = vunpack.c.l.b16 %v786
      %v826 = vunpack.c.l.b16 %v787
      %v827 = vunpack.c.l.b16 %v788
      %v828 = vunpack.c.l.b16 %v789
      %v829 = vunpack.c.l.b16 %v790
      %v830 = vunpack.c.l.b16 %v791
      %v831 = vunpack.c.l.b16 %v792
      %v832 = vunpack.c.l.b16 %v793
      %v833 = vunpack.c.l.b16 %v794
      %v834 = vunpack.c.l.b16 %v795
      %v835 = vunpack.c.l.b16 %v796
      %v836 = vunpack.c.l.b16 %v797
      %v837 = vunpack.c.l.b16 %v798
      %v838 = vunpack.c.l.b16 %v799
      %v839 = vunpack.c.l.b16 %v800
      %v840 = vpack.c.b16 %v825, %v824
      %v841 = vpack.c.b16 %v827, %v826
      %v842 = vpack.c.b16 %v829, %v828
      %v843 = vpack.c.b16 %v831, %v830
      %v844 = vpack.c.b16 %v833, %v832
      %v845 = vpack.c.b16 %v835, %v834
      %v846 = vpack.c.b16 %v837, %v836
      %v847 = vpack.c.b16 %v839, %v838
      %856 = vmatprep.subr.bf16.mxu0 0
      %857 = vmatpush1.bf16.msra.mxu0 %v847
      %858 = vmatprep.subr.bf16.mxu0 0
      %859 = vmatpush1.bf16.msra.mxu0 %v846
      %860 = vmatprep.subr.bf16.mxu0 0
      %861 = vmatpush1.bf16.msra.mxu0 %v845
      %862 = vmatprep.subr.bf16.mxu0 0
      %863 = vmatpush1.bf16.msra.mxu0 %v844
      %864 = vmatprep.subr.bf16.mxu0 0
      %865 = vmatpush1.bf16.msra.mxu0 %v843
      %866 = vmatprep.subr.bf16.mxu0 0
      %867 = vmatpush1.bf16.msra.mxu0 %v842
      %868 = vmatprep.subr.bf16.mxu0 0
      %869 = vmatpush1.bf16.msra.mxu0 %v841
      %870 = vmatprep.subr.bf16.mxu0 0
      %871 = vmatpush1.bf16.msra.mxu0 %v840
      %872 = vmatprep.subr.bf16.mxu0 0
      %873 = vmatpush2.bf16.msra.mxu0 0
      %874 = vmatprep.subr.bf16.mxu0 0
      %875 = vmatpush2.bf16.msra.mxu0 0
      %876 = vmatprep.subr.bf16.mxu0 0
      %877 = vmatpush2.bf16.msra.mxu0 0
      %878 = vmatprep.subr.bf16.mxu0 0
      %879 = vmatpush2.bf16.msra.mxu0 0
      %880 = vmatprep.subr.bf16.mxu0 0
      %881 = vmatpush2.bf16.msra.mxu0 0
      %882 = vmatprep.subr.bf16.mxu0 0
      %883 = vmatpush2.bf16.msra.mxu0 0
      %884 = vmatprep.subr.bf16.mxu0 0
      %885 = vmatpush2.bf16.msra.mxu0 0
      %886 = vmatprep.subr.bf16.mxu0 0
      %887 = vmatpush2.bf16.msra.mxu0 0
      %888 = vmatprep.mubr.bf16.mxu0 0
      %889 = vmatmul.mubr.bf16.gmra.mxu0 %v777
      %v890 = vpop.f32.mrf.mxu0
      %v891 = vadd.f32 %v806, %v890
      %v892 = vpop.f32.mrf.mxu0
      %v893 = vpop.f32.mrf.mxu0
      %v894 = vadd.f32 %v806, %v893
      %v895 = vpop.f32.mrf.mxu0
      %896 = vmatprep.mubr.bf16.mxu0 0
      %897 = vmatmul.mubr.bf16.gmra.mxu0 %v778
      %v898 = vpop.f32.mrf.mxu0
      %v899 = vadd.f32 %v806, %v898
      %v900 = vpop.f32.mrf.mxu0
      %v901 = vpop.f32.mrf.mxu0
      %v902 = vadd.f32 %v806, %v901
      %v903 = vpop.f32.mrf.mxu0
      %904 = vmatprep.mubr.bf16.mxu0 0
      %905 = vmatmul.mubr.bf16.gmra.mxu0 %v779
      %v906 = vpop.f32.mrf.mxu0
      %v907 = vadd.f32 %v806, %v906
      %v908 = vpop.f32.mrf.mxu0
      %v909 = vpop.f32.mrf.mxu0
      %v910 = vadd.f32 %v806, %v909
      %v911 = vpop.f32.mrf.mxu0
      %912 = vmatprep.mubr.bf16.mxu0 0
      %913 = vmatmul.mubr.bf16.gmra.mxu0 %v780
      %v914 = vpop.f32.mrf.mxu0
      %v915 = vadd.f32 %v806, %v914
      %v916 = vpop.f32.mrf.mxu0
      %v917 = vpop.f32.mrf.mxu0
      %v918 = vadd.f32 %v806, %v917
      %v919 = vpop.f32.mrf.mxu0
      %920 = vmatprep.mubr.bf16.mxu0 0
      %921 = vmatmul.mubr.bf16.gmra.mxu0 %v781
      %v922 = vpop.f32.mrf.mxu0
      %v923 = vadd.f32 %v806, %v922
      %v924 = vpop.f32.mrf.mxu0
      %v925 = vpop.f32.mrf.mxu0
      %v926 = vadd.f32 %v806, %v925
      %v927 = vpop.f32.mrf.mxu0
      %928 = vmatprep.mubr.bf16.mxu0 0
      %929 = vmatmul.mubr.bf16.gmra.mxu0 %v782
      %v930 = vpop.f32.mrf.mxu0
      %v931 = vadd.f32 %v806, %v930
      %v932 = vpop.f32.mrf.mxu0
      %v933 = vpop.f32.mrf.mxu0
      %v934 = vadd.f32 %v806, %v933
      %v935 = vpop.f32.mrf.mxu0
      %936 = vmatprep.mubr.bf16.mxu0 0
      %937 = vmatmul.mubr.bf16.gmra.mxu0 %v783
      %v938 = vpop.f32.mrf.mxu0
      %v939 = vadd.f32 %v806, %v938
      %v940 = vpop.f32.mrf.mxu0
      %v941 = vpop.f32.mrf.mxu0
      %v942 = vadd.f32 %v806, %v941
      %v943 = vpop.f32.mrf.mxu0
      %944 = vmatprep.mubr.bf16.mxu0 0
      %945 = vmatmul.mubr.bf16.gmra.mxu0 %v784
      %v946 = vpop.f32.mrf.mxu0
      %v947 = vadd.f32 %v806, %v946
      %v948 = vpop.f32.mrf.mxu0
      %v949 = vpop.f32.mrf.mxu0
      %v950 = vadd.f32 %v806, %v949
      %v951 = vpop.f32.mrf.mxu0
      %952 = vdwg.mxu0
      %v953 = vmax.f32 %v891, 0.0
      %v954 = vmax.f32 %v894, 0.0
      %v955 = vmax.f32 %v899, 0.0
      %v956 = vmax.f32 %v902, 0.0
      %v957 = vmax.f32 %v907, 0.0
      %v958 = vmax.f32 %v910, 0.0
      %v959 = vmax.f32 %v915, 0.0
      %v960 = vmax.f32 %v918, 0.0
      %v961 = vmax.f32 %v923, 0.0
      %v962 = vmax.f32 %v926, 0.0
      %v963 = vmax.f32 %v931, 0.0
      %v964 = vmax.f32 %v934, 0.0
      %v965 = vmax.f32 %v939, 0.0
      %v966 = vmax.f32 %v942, 0.0
      %v967 = vmax.f32 %v947, 0.0
      %v968 = vmax.f32 %v950, 0.0
      %v969 = vpack.c.bf16 %v954, %v953
      %v970 = vpack.c.bf16 %v956, %v955
      %v971 = vpack.c.bf16 %v958, %v957
      %v972 = vpack.c.bf16 %v960, %v959
      %v973 = vpack.c.bf16 %v962, %v961
      %v974 = vpack.c.bf16 %v964, %v963
      %v975 = vpack.c.bf16 %v966, %v965
      %v976 = vpack.c.bf16 %v968, %v967
      %v977 = vld [vmem:[%s7] sm:$0xf]
      %v978 = vld [vmem:[%s7 + $0x4] sm:$0xf]
      %v979 = vld [vmem:[%s7 + $0x8] sm:$0xf]
      %v980 = vld [vmem:[%s7 + $0xc] sm:$0xf]
      %v981 = vld [vmem:[%s7 + $0x10] sm:$0xf]
      %v982 = vld [vmem:[%s7 + $0x14] sm:$0xf]
      %v983 = vld [vmem:[%s7 + $0x18] sm:$0xf]
      %v984 = vld [vmem:[%s7 + $0x1c] sm:$0xf]
      %v985 = vld [vmem:[%s7 + $0x20] sm:$0xf]
      %v986 = vld [vmem:[%s7 + $0x24] sm:$0xf]
      %v987 = vld [vmem:[%s7 + $0x28] sm:$0xf]
      %v988 = vld [vmem:[%s7 + $0x2c] sm:$0xf]
      %v989 = vld [vmem:[%s7 + $0x30] sm:$0xf]
      %v990 = vld [vmem:[%s7 + $0x34] sm:$0xf]
      %v991 = vld [vmem:[%s7 + $0x38] sm:$0xf]
      %v992 = vld [vmem:[%s7 + $0x3c] sm:$0xf]
      %v993 = vld [vmem:[%s8] sm:$0x1]
      %v995 = vlaneseq
      %v996 = vshrl.u32 %v995, 7
      %v997 = vsub.s32 0, %v996
      %v998 = vrot.slane %v993, %v997
      %v1016 = vunpack.c.l.b16 %v977
      %v1017 = vunpack.c.l.b16 %v978
      %v1018 = vunpack.c.l.b16 %v979
      %v1019 = vunpack.c.l.b16 %v980
      %v1020 = vunpack.c.l.b16 %v981
      %v1021 = vunpack.c.l.b16 %v982
      %v1022 = vunpack.c.l.b16 %v983
      %v1023 = vunpack.c.l.b16 %v984
      %v1024 = vunpack.c.l.b16 %v985
      %v1025 = vunpack.c.l.b16 %v986
      %v1026 = vunpack.c.l.b16 %v987
      %v1027 = vunpack.c.l.b16 %v988
      %v1028 = vunpack.c.l.b16 %v989
      %v1029 = vunpack.c.l.b16 %v990
      %v1030 = vunpack.c.l.b16 %v991
      %v1031 = vunpack.c.l.b16 %v992
      %v1032 = vpack.c.b16 %v1017, %v1016
      %v1033 = vpack.c.b16 %v1019, %v1018
      %v1034 = vpack.c.b16 %v1021, %v1020
      %v1035 = vpack.c.b16 %v1023, %v1022
      %v1036 = vpack.c.b16 %v1025, %v1024
      %v1037 = vpack.c.b16 %v1027, %v1026
      %v1038 = vpack.c.b16 %v1029, %v1028
      %v1039 = vpack.c.b16 %v1031, %v1030
      %1048 = vmatprep.subr.bf16.mxu0 0
      %1049 = vmatpush1.bf16.msra.mxu0 %v1039
      %1050 = vmatprep.subr.bf16.mxu0 0
      %1051 = vmatpush1.bf16.msra.mxu0 %v1038
      %1052 = vmatprep.subr.bf16.mxu0 0
      %1053 = vmatpush1.bf16.msra.mxu0 %v1037
      %1054 = vmatprep.subr.bf16.mxu0 0
      %1055 = vmatpush1.bf16.msra.mxu0 %v1036
      %1056 = vmatprep.subr.bf16.mxu0 0
      %1057 = vmatpush1.bf16.msra.mxu0 %v1035
      %1058 = vmatprep.subr.bf16.mxu0 0
      %1059 = vmatpush1.bf16.msra.mxu0 %v1034
      %1060 = vmatprep.subr.bf16.mxu0 0
      %1061 = vmatpush1.bf16.msra.mxu0 %v1033
      %1062 = vmatprep.subr.bf16.mxu0 0
      %1063 = vmatpush1.bf16.msra.mxu0 %v1032
      %1064 = vmatprep.subr.bf16.mxu0 0
      %1065 = vmatpush2.bf16.msra.mxu0 0
      %1066 = vmatprep.subr.bf16.mxu0 0
      %1067 = vmatpush2.bf16.msra.mxu0 0
      %1068 = vmatprep.subr.bf16.mxu0 0
      %1069 = vmatpush2.bf16.msra.mxu0 0
      %1070 = vmatprep.subr.bf16.mxu0 0
      %1071 = vmatpush2.bf16.msra.mxu0 0
      %1072 = vmatprep.subr.bf16.mxu0 0
      %1073 = vmatpush2.bf16.msra.mxu0 0
      %1074 = vmatprep.subr.bf16.mxu0 0
      %1075 = vmatpush2.bf16.msra.mxu0 0
      %1076 = vmatprep.subr.bf16.mxu0 0
      %1077 = vmatpush2.bf16.msra.mxu0 0
      %1078 = vmatprep.subr.bf16.mxu0 0
      %1079 = vmatpush2.bf16.msra.mxu0 0
      %1080 = vmatprep.mubr.bf16.mxu0 0
      %1081 = vmatmul.mubr.bf16.gmra.mxu0 %v969
      %v1082 = vpop.f32.mrf.mxu0
      %v1083 = vadd.f32 %v998, %v1082
      %v1084 = vpop.f32.mrf.mxu0
      %v1085 = vpop.f32.mrf.mxu0
      %v1086 = vadd.f32 %v998, %v1085
      %v1087 = vpop.f32.mrf.mxu0
      %1088 = vmatprep.mubr.bf16.mxu0 0
      %1089 = vmatmul.mubr.bf16.gmra.mxu0 %v970
      %v1090 = vpop.f32.mrf.mxu0
      %v1091 = vadd.f32 %v998, %v1090
      %v1092 = vpop.f32.mrf.mxu0
      %v1093 = vpop.f32.mrf.mxu0
      %v1094 = vadd.f32 %v998, %v1093
      %v1095 = vpop.f32.mrf.mxu0
      %1096 = vmatprep.mubr.bf16.mxu0 0
      %1097 = vmatmul.mubr.bf16.gmra.mxu0 %v971
      %v1098 = vpop.f32.mrf.mxu0
      %v1099 = vadd.f32 %v998, %v1098
      %v1100 = vpop.f32.mrf.mxu0
      %v1101 = vpop.f32.mrf.mxu0
      %v1102 = vadd.f32 %v998, %v1101
      %v1103 = vpop.f32.mrf.mxu0
      %1104 = vmatprep.mubr.bf16.mxu0 0
      %1105 = vmatmul.mubr.bf16.gmra.mxu0 %v972
      %v1106 = vpop.f32.mrf.mxu0
      %v1107 = vadd.f32 %v998, %v1106
      %v1108 = vpop.f32.mrf.mxu0
      %v1109 = vpop.f32.mrf.mxu0
      %v1110 = vadd.f32 %v998, %v1109
      %v1111 = vpop.f32.mrf.mxu0
      %1112 = vmatprep.mubr.bf16.mxu0 0
      %1113 = vmatmul.mubr.bf16.gmra.mxu0 %v973
      %v1114 = vpop.f32.mrf.mxu0
      %v1115 = vadd.f32 %v998, %v1114
      %v1116 = vpop.f32.mrf.mxu0
      %v1117 = vpop.f32.mrf.mxu0
      %v1118 = vadd.f32 %v998, %v1117
      %v1119 = vpop.f32.mrf.mxu0
      %1120 = vmatprep.mubr.bf16.mxu0 0
      %1121 = vmatmul.mubr.bf16.gmra.mxu0 %v974
      %v1122 = vpop.f32.mrf.mxu0
      %v1123 = vadd.f32 %v998, %v1122
      %v1124 = vpop.f32.mrf.mxu0
      %v1125 = vpop.f32.mrf.mxu0
      %v1126 = vadd.f32 %v998, %v1125
      %v1127 = vpop.f32.mrf.mxu0
      %1128 = vmatprep.mubr.bf16.mxu0 0
      %1129 = vmatmul.mubr.bf16.gmra.mxu0 %v975
      %v1130 = vpop.f32.mrf.mxu0
      %v1131 = vadd.f32 %v998, %v1130
      %v1132 = vpop.f32.mrf.mxu0
      %v1133 = vpop.f32.mrf.mxu0
      %v1134 = vadd.f32 %v998, %v1133
      %v1135 = vpop.f32.mrf.mxu0
      %1136 = vmatprep.mubr.bf16.mxu0 0
      %1137 = vmatmul.mubr.bf16.gmra.mxu0 %v976
      %v1138 = vpop.f32.mrf.mxu0
      %v1139 = vadd.f32 %v998, %v1138
      %v1140 = vpop.f32.mrf.mxu0
      %v1141 = vpop.f32.mrf.mxu0
      %v1142 = vadd.f32 %v998, %v1141
      %v1143 = vpop.f32.mrf.mxu0
      %1144 = vdwg.mxu0
      %1145 = vst [vmem:[%s334] sm:$0xff] %v1083
      %1146 = vst [vmem:[%s334 + $0x8] sm:$0xff] %v1086
      %1147 = vst [vmem:[%s334 + $0x10] sm:$0xff] %v1091
      %1148 = vst [vmem:[%s334 + $0x18] sm:$0xff] %v1094
      %1149 = vst [vmem:[%s334 + $0x20] sm:$0xff] %v1099
      %1150 = vst [vmem:[%s334 + $0x28] sm:$0xff] %v1102
      %1151 = vst [vmem:[%s334 + $0x30] sm:$0xff] %v1107
      %1152 = vst [vmem:[%s334 + $0x38] sm:$0xff] %v1110
      %1153 = vst [vmem:[%s334 + $0x40] sm:$0xff] %v1115
      %1154 = vst [vmem:[%s334 + $0x48] sm:$0xff] %v1118
      %1155 = vst [vmem:[%s334 + $0x50] sm:$0xff] %v1123
      %1156 = vst [vmem:[%s334 + $0x58] sm:$0xff] %v1126
      %1157 = vst [vmem:[%s334 + $0x60] sm:$0xff] %v1131
      %1158 = vst [vmem:[%s334 + $0x68] sm:$0xff] %v1134
      %1159 = vst [vmem:[%s334 + $0x70] sm:$0xff] %v1139
      %1160 = vst [vmem:[%s334 + $0x78] sm:$0xff] %v1142
      %s1161 = smul.u32 16, %s20
      %p1162 = scmp.lt.s32.totalorder %s1161, 31
      %s1163 = scalar_select %p1162, %s1161, 31
      %s1164 = smul.addr %s1163, 8
      %s1165 = scalar_lea.vmem %s9, %s1164
      // Predicated region
      $region57: #{net_forward.1} parent=55 // pred_check
        %p1166 = pneg %p232
      $region58: #{net_forward.1} parent=55 // pred_check_branch
        %1168 = sbr.rel (%p1166) target = $region60
      $region59: #{net_forward.1} parent=55 // pred_region
        %s1169 = smul.u32 16, %s20
      $region60: #{net_forward.1} parent=55 // pred_fallthru
        _
    $region56: #{net_forward.1} parent=5 // pred_fallthru
      _
    %p1170 = scmp.le.s32.totalorder 2, %s15
    // Predicated region
    $region61: #{net_forward.1} parent=5 // pred_check
      %p1171 = pneg %p1170
    $region62: #{net_forward.1} parent=5 // pred_check_branch
      %1173 = sbr.rel (%p1171) target = $region64
    $region63: #{net_forward.1} parent=5 // pred_region
      %s1174 = ssub.s32 %s15, 2
      // Predicated region
      $region65: #{net_forward.1} parent=63 // pred_check
        %p1175 = pneg %p238
      $region66: #{net_forward.1} parent=63 // pred_check_branch
        %1177 = sbr.rel (%p1175) target = $region68
      $region67: #{net_forward.1} parent=63 // pred_region
        %s1178 = smul.u32 16, %s21
        %p1179 = scmp.lt.s32.totalorder %s1178, 31
        %s1180 = scalar_select %p1179, %s1178, 31
        %s1181 = smul.addr %s1180, 8
        %s1182 = scalar_lea.vmem %s9, %s1181
      $region68: #{net_forward.1} parent=63 // pred_fallthru
        _
    $region64: #{net_forward.1} parent=5 // pred_fallthru
      _
  $region6: #{net_forward.1} parent=0 // loop_footer
    %s19 = sadd.s32 1, %s15
  $region7: #{net_forward.1} parent=0 // loop_footer_branch
    %14 = sbr.rel target = $region3
  $region8: #{net_forward.1} parent=0 // loop_exit
    _

</llo_original>
